<compile_context>
chip_gen: v5e
topology: v5e:2x2
jax: 0.10.0
libtpu: 0.0.40
codegen_flags: <defaults>
</compile_context>

<pallas_src>
import functools

import jax
import jax.numpy as jnp
from jax.experimental import pallas as pl
from jax.experimental.pallas import tpu as pltpu

_LANE = 128


def _cdiv(a, b):
    return -(-a // b)


def _round_up(a, m):
    return _cdiv(a, m) * m


def _sublane_align(dtype):
    # Minimum sublane multiple for a packed dtype: 8 (4B), 16 (2B), 32 (1B).
    return max(8, 32 // jnp.dtype(dtype).itemsize)


def _smoothed_bce_sum_kernel(x_ref, t_ref, out_ref, *, smoothing,
                             blocks_per_part, block_rows, total_valid,
                             need_mask):
    p = pl.program_id(0)      # partition axis (megacore split on v7x)
    i = pl.program_id(1)      # reduction axis over row-blocks

    @pl.when(i == 0)
    def _():
        out_ref[...] = jnp.zeros_like(out_ref)

    # Cast in-kernel (cheap VPU work hidden under the HBM DMA).
    x = x_ref[...].astype(jnp.float32)
    t = t_ref[...].astype(jnp.float32)

    # Label smoothing folded: t*(1-s) + (1-t)*s == t*(1-2s) + s
    st = t * (1.0 - 2.0 * smoothing) + smoothing

    # Numerically-stable BCE-with-logits (matches PyTorch):
    #   max(x, 0) - x*st + log1p(exp(-|x|))
    per = jnp.maximum(x, 0.0) - x * st + jnp.log1p(jnp.exp(-jnp.abs(x)))

    if need_mask:
        # Zero contributions past the valid element count (ragged last block
        # and/or zero-padded tail).  Garbage/NaN in the ragged region is
        # discarded by the select, never multiplied.
        rows, lanes = per.shape
        row = jax.lax.broadcasted_iota(jnp.int32, (rows, lanes), 0)
        col = jax.lax.broadcasted_iota(jnp.int32, (rows, lanes), 1)
        blk = p * blocks_per_part + i
        gidx = (blk * block_rows + row) * lanes + col
        per = jnp.where(gidx < total_valid, per, 0.0)

    # Accumulate into the resident (8, LANE) output block: plain vreg+vreg
    # adds (VPU), no per-step cross-lane reduce, lane-dense unmasked stores.
    out_ref[...] += jnp.sum(per.reshape(-1, 8, per.shape[-1]), axis=0)


def _choose_blocking(rows, row_align, target_block_rows):
    block_rows = min(int(target_block_rows), _round_up(rows, row_align))
    block_rows = _round_up(block_rows, row_align)
    n_blocks = _cdiv(rows, block_rows)
    num_parts = 1
    if n_blocks >= 2:
        if n_blocks % 2 == 0:
            num_parts = 2
        else:
            # Retune for an even block count so both v7x TensorCores get equal
            # work, without creating phantom (fully out-of-range) blocks.
            br = _round_up(_cdiv(rows, n_blocks + 1), row_align)
            nb = _cdiv(rows, br)
            if nb % 2 == 0:
                block_rows, n_blocks, num_parts = br, nb, 2
    return block_rows, n_blocks, num_parts


def smoothed_bce_with_logits_loss(output, target, label_smoothing_value,
                                  *, target_block_rows=4096):
    assert 0.0 < label_smoothing_value < 0.5, \
        "Label Smoothing value shoud be in (0, 0.5)"
    assert output.shape == target.shape

    total = int(output.size)
    row_align = max(_sublane_align(output.dtype), _sublane_align(target.dtype))

    x = output.reshape(-1)
    t = target.reshape(-1)

    # Only pad (a real HBM copy) when the flat size is not lane-divisible.
    if total % _LANE:
        padded_total = _round_up(total, _LANE * row_align)
        n_pad = padded_total - total
        x = jnp.pad(x, (0, n_pad))
        t = jnp.pad(t, (0, n_pad))
    else:
        padded_total = total

    rows = padded_total // _LANE                 # actual array rows
    x2 = x.reshape(rows, _LANE)                  # free reshape (contiguous)
    t2 = t.reshape(rows, _LANE)

    block_rows, n_blocks, num_parts = _choose_blocking(
        rows, row_align, target_block_rows)
    blocks_per_part = n_blocks // num_parts

    covered = n_blocks * block_rows * _LANE      # elements the grid touches
    need_mask = covered != total

    kernel = functools.partial(
        _smoothed_bce_sum_kernel,
        smoothing=float(label_smoothing_value),
        blocks_per_part=int(blocks_per_part),
        block_rows=int(block_rows),
        total_valid=total,
        need_mask=bool(need_mask),
    )

    xb = jnp.dtype(output.dtype).itemsize
    tb = jnp.dtype(target.dtype).itemsize
    cost = pl.CostEstimate(
        flops=8 * total,
        transcendentals=2 * total,               # exp + log1p per element
        bytes_accessed=total * (xb + tb) + num_parts * 8 * _LANE * 4,
    )

    partial = pl.pallas_call(
        kernel,
        out_shape=jax.ShapeDtypeStruct((num_parts * 8, _LANE), jnp.float32),
        grid_spec=pltpu.PrefetchScalarGridSpec(
            num_scalar_prefetch=0,
            grid=(num_parts, blocks_per_part),
            in_specs=[
                pl.BlockSpec((block_rows, _LANE),
                             lambda p, i: (p * blocks_per_part + i, 0)),
                pl.BlockSpec((block_rows, _LANE),
                             lambda p, i: (p * blocks_per_part + i, 0)),
            ],
            out_specs=pl.BlockSpec((8, _LANE), lambda p, i: (p, 0)),
        ),
        compiler_params=pltpu.CompilerParams(
            dimension_semantics=("parallel", "arbitrary"),
            vmem_limit_bytes=32 * 1024 * 1024),
        cost_estimate=cost,
    )(x2, t2)

    # Tiny epilogue: one cross-lane reduce over (num_parts*8, 128) + divide.
    return jnp.sum(partial) / jnp.float32(total)


def _reference(output, target, s):
    tf = target.astype(jnp.float32)
    st = tf * (1.0 - s) + (1.0 - tf) * s
    x = output.astype(jnp.float32)
    per = jnp.maximum(x, 0.0) - x * st + jnp.log1p(jnp.exp(-jnp.abs(x)))
    return jnp.mean(per)


if __name__ == "__main__":
    key = jax.random.PRNGKey(0)
    s = 0.1
    ks = jax.random.split(key, 10)

    # 1) Canonical small NCHW case (lane-divisible, single block, no mask).
    out_a = jax.random.normal(ks[0], (2, 4, 16, 16), dtype=jnp.float32)
    tgt_a = (jax.random.uniform(ks[1], (2, 4, 16, 16)) > 0.5).astype(jnp.float32)
    loss_a = jax.block_until_ready(smoothed_bce_with_logits_loss(out_a, tgt_a, s))
    ref_a = _reference(out_a, tgt_a, s)
    assert jnp.allclose(loss_a, ref_a, atol=1e-5, rtol=1e-5), (loss_a, ref_a)

    # 2) Awkward size not divisible by 128 (exercises small pad + mask path).
    out_b = jax.random.normal(ks[2], (3, 5, 7, 11), dtype=jnp.float32)
    tgt_b = (jax.random.uniform(ks[3], (3, 5, 7, 11)) > 0.5).astype(jnp.float32)
    loss_b = jax.block_until_ready(smoothed_bce_with_logits_loss(out_b, tgt_b, s))
    ref_b = _reference(out_b, tgt_b, s)
    assert jnp.allclose(loss_b, ref_b, atol=1e-5, rtol=1e-5), (loss_b, ref_b)

    # 3) Multi-block, evenly divisible (accumulation + 2-partition split, no mask).
    out_c = jax.random.normal(ks[4], (4, 4, 32, 32), dtype=jnp.float32)
    tgt_c = (jax.random.uniform(ks[5], (4, 4, 32, 32)) > 0.5).astype(jnp.float32)
    loss_c = jax.block_until_ready(
        smoothed_bce_with_logits_loss(out_c, tgt_c, s, target_block_rows=32))
    ref_c = _reference(out_c, tgt_c, s)
    assert jnp.allclose(loss_c, ref_c, atol=1e-5, rtol=1e-5), (loss_c, ref_c)

    # 4) Lane-divisible but ragged row count (odd->even block retune, ragged
    #    last block masked in-kernel, NO pad copy).
    out_d = jax.random.normal(ks[6], (5, 4, 24, 16), dtype=jnp.float32)
    tgt_d = (jax.random.uniform(ks[7], (5, 4, 24, 16)) > 0.5).astype(jnp.float32)
    loss_d = jax.block_until_ready(
        smoothed_bce_with_logits_loss(out_d, tgt_d, s, target_block_rows=24))
    ref_d = _reference(out_d, tgt_d, s)
    assert jnp.allclose(loss_d, ref_d, atol=1e-5, rtol=1e-5), (loss_d, ref_d)

    # 5) bf16 logits with f32 targets (in-kernel cast, 16-row sublane align).
    out_e = jax.random.normal(ks[8], (2, 4, 16, 16), dtype=jnp.bfloat16)
    tgt_e = (jax.random.uniform(ks[9], (2, 4, 16, 16)) > 0.5).astype(jnp.float32)
    loss_e = jax.block_until_ready(smoothed_bce_with_logits_loss(out_e, tgt_e, s))
    ref_e = _reference(out_e, tgt_e, s)
    assert jnp.allclose(loss_e, ref_e, atol=1e-4, rtol=1e-4), (loss_e, ref_e)

    print("KERNEL_OK")
</pallas_src>

<mosaic_0001>
module attributes {stable_mosaic.version = 11 : i64} {
  func.func @_smoothed_bce_sum_kernel(%arg0: i32, %arg1: i32, %arg2: memref<16x128xf32, #tpu.memory_space<vmem>>, %arg3: memref<16x128xf32, #tpu.memory_space<vmem>>, %arg4: memref<8x128xf32, #tpu.memory_space<vmem>>) attributes {dimension_semantics = [#tpu.dimension_semantics<parallel>, #tpu.dimension_semantics<arbitrary>], iteration_bounds = array<i64: 1, 1>, scalar_prefetch = 0 : i64, scratch_operands = 0 : i64, tpu.core_type = #tpu.core_type<tc>, window_params = [{transform_indices = @transform_0, window_bounds = array<i64: 16, 128>}, {transform_indices = @transform_1, window_bounds = array<i64: 16, 128>}, {transform_indices = @transform_2, window_bounds = array<i64: 8, 128>}]} {
    %c0_i32 = arith.constant 0 : i32
    %0 = arith.cmpi eq, %arg1, %c0_i32 : i32
    %1 = arith.extui %0 : i1 to i32
    %c0_i32_0 = arith.constant 0 : i32
    %2 = arith.cmpi ne, %1, %c0_i32_0 : i32
    scf.if %2 {
      %cst_12 = arith.constant 0.000000e+00 : f32
      %24 = vector.broadcast %cst_12 : f32 to vector<8x128xf32>
      %c0_13 = arith.constant 0 : index
      %c0_14 = arith.constant 0 : index
      %25 = vector.load %arg4[%c0_13, %c0_14] : memref<8x128xf32, #tpu.memory_space<vmem>>, vector<8x128xf32>
      tpu.vector_store %arg4[%c0_13, %c0_14], %24 {strides = array<i32>} : memref<8x128xf32, #tpu.memory_space<vmem>>, vector<8x128xf32>,
    } else {
    }
    %c0 = arith.constant 0 : index
    %c0_1 = arith.constant 0 : index
    %3 = vector.load %arg2[%c0, %c0_1] : memref<16x128xf32, #tpu.memory_space<vmem>>, vector<16x128xf32>
    %c0_2 = arith.constant 0 : index
    %c0_3 = arith.constant 0 : index
    %4 = vector.load %arg3[%c0_2, %c0_3] : memref<16x128xf32, #tpu.memory_space<vmem>>, vector<16x128xf32>
    %cst = arith.constant 8.000000e-01 : f32
    %5 = vector.broadcast %cst : f32 to vector<16x128xf32>
    %6 = arith.mulf %4, %5 : vector<16x128xf32>
    %cst_4 = arith.constant 1.000000e-01 : f32
    %7 = vector.broadcast %cst_4 : f32 to vector<16x128xf32>
    %8 = arith.addf %6, %7 : vector<16x128xf32>
    %cst_5 = arith.constant 0.000000e+00 : f32
    %9 = vector.broadcast %cst_5 : f32 to vector<16x128xf32>
    %10 = arith.maximumf %3, %9 : vector<16x128xf32>
    %11 = arith.mulf %3, %8 : vector<16x128xf32>
    %12 = arith.subf %10, %11 : vector<16x128xf32>
    %13 = math.absf %3 : vector<16x128xf32>
    %cst_6 = arith.constant 0.000000e+00 : f32
    %14 = vector.broadcast %cst_6 : f32 to vector<16x128xf32>
    %15 = arith.subf %14, %13 : vector<16x128xf32>
    %16 = math.exp %15 : vector<16x128xf32>
    %17 = math.log1p %16 : vector<16x128xf32>
    %18 = arith.addf %12, %17 : vector<16x128xf32>
    %c0_7 = arith.constant 0 : index
    %c0_8 = arith.constant 0 : index
    %19 = vector.load %arg4[%c0_7, %c0_8] : memref<8x128xf32, #tpu.memory_space<vmem>>, vector<8x128xf32>
    %20 = vector.shape_cast %18 : vector<16x128xf32> to vector<2x8x128xf32>
    %cst_9 = arith.constant dense<0.000000e+00> : vector<8x128xf32>
    %21 = vector.multi_reduction <add>, %20, %cst_9 [0] : vector<2x8x128xf32> to vector<8x128xf32>
    %22 = arith.addf %19, %21 : vector<8x128xf32>
    %c0_10 = arith.constant 0 : index
    %c0_11 = arith.constant 0 : index
    %23 = vector.load %arg4[%c0_10, %c0_11] : memref<8x128xf32, #tpu.memory_space<vmem>>, vector<8x128xf32>
    tpu.vector_store %arg4[%c0_10, %c0_11], %22 {strides = array<i32>} : memref<8x128xf32, #tpu.memory_space<vmem>>, vector<8x128xf32>,
    return
  }
  func.func @transform_0(%arg0: i32, %arg1: i32) -> (i32, i32) {
    %c1_i32 = arith.constant 1 : i32
    %0 = arith.muli %arg0, %c1_i32 : i32
    %1 = arith.addi %0, %arg1 : i32
    %c0_i32 = arith.constant 0 : i32
    %c0_i32_0 = arith.constant 0 : i32
    return %1, %c0_i32 : i32, i32
  }
  func.func @transform_1(%arg0: i32, %arg1: i32) -> (i32, i32) {
    %c1_i32 = arith.constant 1 : i32
    %0 = arith.muli %arg0, %c1_i32 : i32
    %1 = arith.addi %0, %arg1 : i32
    %c0_i32 = arith.constant 0 : i32
    %c0_i32_0 = arith.constant 0 : i32
    return %1, %c0_i32 : i32, i32
  }
  func.func @transform_2(%arg0: i32, %arg1: i32) -> (i32, i32) {
    %c0_i32 = arith.constant 0 : i32
    %c0_i32_0 = arith.constant 0 : i32
    return %arg0, %c0_i32 : i32, i32
  }
}

</mosaic_0001>

<llo_original>
// kernel: tpu_custom_call.1
$region0: #{tpu_custom_call.1}
  #allocation0 [shape = 'u32[]', space=smem, size = 0x4, offset = 0x4, fixed_abs, tag = 'smem constant byte address 0x4 - core index']
  #allocation1 [shape = 'u32[72,128]{1,0:T(1,128)}', space=vmem, size = 0x9000, scoped, tag = 'internal scratch']
  %s0 = inlined_call_operand.hbm [shape: f32[16,128], index: 0, kind: input, shape index: {}]
  %s1 = inlined_call_operand.hbm [shape: f32[16,128], index: 1, kind: input, shape index: {}]
  %s2 = inlined_call_operand.hbm [shape: f32[8,128], index: 2, kind: output, shape index: {}]
  %s3 = sld [smem:[#allocation0]]
  $region30: #{tpu_custom_call.1} parent=0
    _
  %s5 = ssub.s32 1, %s3
  %s6 = scalar_select 0, %s5, %s3
  $region1: #{tpu_custom_call.1} parent=0
    #allocation2 [shape = 'u8[8192]{0}', space=vmem, size = 0x2000, scoped, tag = 'input window, operand 0, single buffered']
    #allocation3 [shape = 's32[1]{0}', space=sflag, size = 0x4, scoped, tag = 'scoped memory for tpu_custom_call.1']
    #allocation4 [shape = 's32[1]{0}', space=sflag, size = 0x4, scoped, tag = 'scoped memory for tpu_custom_call.1']
    #allocation5 [shape = 'u8[8192]{0}', space=vmem, size = 0x2000, scoped, tag = 'input window, operand 1, single buffered']
    #allocation6 [shape = 's32[1]{0}', space=sflag, size = 0x4, scoped, tag = 'scoped memory for tpu_custom_call.1']
    #allocation7 [shape = 'u8[4096]{0}', space=vmem, size = 0x1000, scoped, tag = 'output window, operand 0, single buffered']
    %7 = vsyncpa [#allocation3], 0
    %8 = vsyncpa [#allocation6], 0
    %9 = vsyncpa [#allocation4], 0
    // Predicated region
    $region2: #{tpu_custom_call.1} parent=1 // pred_check
      _
    $region3: #{tpu_custom_call.1} parent=1 // pred_check_branch
      %11 = sbr.rel (0) target = $region5
    $region4: #{tpu_custom_call.1} parent=1 // pred_region
      %s12 = sadd.s32 0, 0
      %s13 = smul.u32 2, %s12
      %15 = vsyncadd [#allocation3], 0
      %s16 = smul.addr %s13, 8
      %s17 = scalar_lea.hbm %s0, %s16
      %s18 = sshll.u32 %s17, 4
      %s19 = int_to_ptr.hbm [resolvable:$true] %s18
      %s20 = sshll.u32 [#allocation2], 4
      %s21 = int_to_ptr.vmem [resolvable:$true] %s20
      %26 = dma.hbm_to_vmem [thread:$0]  %s19, 256, %s21, [#allocation3], 128, 128, 8
    $region5: #{tpu_custom_call.1} parent=1 // pred_fallthru
      _
    // Predicated region
    $region6: #{tpu_custom_call.1} parent=1 // pred_check
      _
    $region7: #{tpu_custom_call.1} parent=1 // pred_check_branch
      %28 = sbr.rel (0) target = $region9
    $region8: #{tpu_custom_call.1} parent=1 // pred_region
      %s29 = sadd.s32 0, 0
      %s30 = smul.u32 2, %s29
      %32 = vsyncadd [#allocation6], 0
      %s33 = smul.addr %s30, 8
      %s34 = scalar_lea.hbm %s1, %s33
      %s35 = sshll.u32 %s34, 4
      %s36 = int_to_ptr.hbm [resolvable:$true] %s35
      %s37 = sshll.u32 [#allocation5], 4
      %s38 = int_to_ptr.vmem [resolvable:$true] %s37
      %43 = dma.hbm_to_vmem [thread:$0]  %s36, 256, %s38, [#allocation6], 128, 128, 8
    $region9: #{tpu_custom_call.1} parent=1 // pred_fallthru
      _
    // Predicated region
    $region10: #{tpu_custom_call.1} parent=1 // pred_check
      _
    $region11: #{tpu_custom_call.1} parent=1 // pred_check_branch
      %45 = sbr.rel (0) target = $region13
    $region12: #{tpu_custom_call.1} parent=1 // pred_region
      %47 = dma.done [#allocation3], 256
    $region13: #{tpu_custom_call.1} parent=1 // pred_fallthru
      _
    // Predicated region
    $region14: #{tpu_custom_call.1} parent=1 // pred_check
      _
    $region15: #{tpu_custom_call.1} parent=1 // pred_check_branch
      %49 = sbr.rel (0) target = $region17
    $region16: #{tpu_custom_call.1} parent=1 // pred_region
      %51 = dma.done [#allocation6], 256
    $region17: #{tpu_custom_call.1} parent=1 // pred_fallthru
      _
    %s52 = sadd.s32 0, 0
    %s53 = smul.u32 2, %s52
    %s54 = sadd.s32 0, 0
    %s55 = smul.u32 2, %s54
    %p56 = scmp.eq.s32.totalorder 0, 0
    // Predicated region
    $region18: #{tpu_custom_call.1} parent=1 // pred_check
      %p57 = pneg %p56
    $region19: #{tpu_custom_call.1} parent=1 // pred_check_branch
      %59 = sbr.rel (%p57) target = $region21
    $region20: #{tpu_custom_call.1} parent=1 // pred_region
      %60 = vst [vmem:[#allocation7] sm:$0xff] 0.0
    $region21: #{tpu_custom_call.1} parent=1 // pred_fallthru
      _
    %v61 = vld [vmem:[#allocation2] sm:$0xff]
    %v62 = vld [vmem:[#allocation2 + $0x8] sm:$0xff]
    %v63 = vld [vmem:[#allocation5] sm:$0xff]
    %v64 = vld [vmem:[#allocation5 + $0x8] sm:$0xff]
    %v65 = vmul.f32 %v63, 0.8
    %v66 = vmul.f32 %v64, 0.8
    %v67 = vadd.f32 %v65, 0.1
    %v68 = vadd.f32 %v66, 0.1
    %v69 = vmax.f32 %v61, 0.0
    %v70 = vmax.f32 %v62, 0.0
    %v71 = vmul.f32 %v61, %v67
    %v72 = vmul.f32 %v62, %v68
    %v73 = vsub.f32 %v69, %v71
    %v74 = vsub.f32 %v70, %v72
    %v75 = vand.u32 2147483647, %v61
    %v76 = vand.u32 2147483647, %v62
    %v77 = vsub.f32 0.0, %v75
    %v78 = vsub.f32 0.0, %v76
    %v79 = vmul.f32 %v77, 1.442695
    %v80 = vpow.pop %v79
    %v81 = vmul.f32 %v78, 1.442695
    %v82 = vpow.pop %v81
    %v83 = vadd.f32 %v80, 1.0
    %v84 = vlog2.pop %v83
    %v85 = vmul.f32 %v84, 0.6931472
    %v86 = vmul.f32 -0.5, %v80
    %v87 = vadd.f32 %v86, 1.0
    %v88 = vmul.f32 %v87, %v80
    %v89 = vand.u32 2147483647, %v80
    %vm90 = vcmp.lt.f32.partialorder %v89, 0.0004427343
    %v91 = vsel %vm90, %v88, %v85
    %v92 = vadd.f32 %v82, 1.0
    %v93 = vlog2.pop %v92
    %v94 = vmul.f32 %v93, 0.6931472
    %v95 = vmul.f32 -0.5, %v82
    %v96 = vadd.f32 %v95, 1.0
    %v97 = vmul.f32 %v96, %v82
    %v98 = vand.u32 2147483647, %v82
    %vm99 = vcmp.lt.f32.partialorder %v98, 0.0004427343
    %v100 = vsel %vm99, %v97, %v94
    %v101 = vadd.f32 %v73, %v91
    %v102 = vadd.f32 %v74, %v100
    %v103 = vld [vmem:[#allocation7] sm:$0xff]
    %v104 = vadd.f32 %v101, %v102
    %v105 = vadd.f32 %v103, %v104
    %106 = vst [vmem:[#allocation7] sm:$0xff] %v105
    // Predicated region
    $region22: #{tpu_custom_call.1} parent=1 // pred_check
      _
    $region23: #{tpu_custom_call.1} parent=1 // pred_check_branch
      %108 = sbr.rel (0) target = $region25
    $region24: #{tpu_custom_call.1} parent=1 // pred_region
      %110 = vsyncadd [#allocation4], 0
      %s112 = sshll.u32 [#allocation7], 4
      %s113 = int_to_ptr.vmem [resolvable:$true] %s112
      %s114 = sshll.u32 %s2, 4
      %s115 = int_to_ptr.hbm [resolvable:$true] %s114
      %117 = dma.vmem_to_hbm [thread:$0]  %s113, 128, %s115, [#allocation4]
    $region25: #{tpu_custom_call.1} parent=1 // pred_fallthru
      _
    // Predicated region
    $region26: #{tpu_custom_call.1} parent=1 // pred_check
      _
    $region27: #{tpu_custom_call.1} parent=1 // pred_check_branch
      %119 = sbr.rel (0) target = $region29
    $region28: #{tpu_custom_call.1} parent=1 // pred_region
      %121 = dma.done [#allocation4], 128
    $region29: #{tpu_custom_call.1} parent=1 // pred_fallthru
      _
    %122 = vsyncpa [#allocation3], 1
    %123 = vsyncpa [#allocation6], 1
    %124 = vsyncpa [#allocation4], 1

</llo_original>
